<compile_context>
chip_gen: v5e
topology: v5e:2x2
jax: 0.10.0
libtpu: 0.0.40
codegen_flags: <defaults>
</compile_context>

<pallas_src>
import math
import functools

import jax
import jax.numpy as jnp
from jax.experimental import pallas as pl
from jax.experimental.pallas import tpu as pltpu  # noqa: F401  (kept for TPU-specific params if scaled up)

# ----- small synthetic Electra config (bert.config.hidden_size == HIDDEN) -----
VOCAB = 100
MAX_POS = 64
HIDDEN = 32          # embedding_dim fed into self.fc
N_HEADS = 2
HEAD_DIM = HIDDEN // N_HEADS
N_LAYERS = 2
FFN_DIM = 64
OUTPUT_DIM = 10      # output_dim of the PoS tagger
OUT_PAD = 128        # lane-dense padded classifier width (sliced back to OUTPUT_DIM)
LN_EPS = 1e-12
MXU_DTYPE = jnp.bfloat16  # matmul operand dtype; accumulation stays f32


# --------------------------- in-kernel helpers ---------------------------

def _layernorm(x, g, b):
    mu = jnp.mean(x, axis=-1, keepdims=True)
    var = jnp.mean(jnp.square(x - mu), axis=-1, keepdims=True)
    return (x - mu) * jax.lax.rsqrt(var + LN_EPS) * g + b


def _mm(a, w, bias):
    # bf16 MXU operands, f32 accumulation + f32 bias.
    return jnp.dot(a.astype(MXU_DTYPE), w.astype(MXU_DTYPE),
                   preferred_element_type=jnp.float32) + bias


# --------------------------- Pallas kernels ---------------------------

def _layernorm_kernel(x_ref, g_ref, b_ref, o_ref):
    o_ref[...] = _layernorm(x_ref[...], g_ref[...], b_ref[...])


def layernorm(x, gamma, beta):
    return pl.pallas_call(
        _layernorm_kernel,
        out_shape=jax.ShapeDtypeStruct(x.shape, jnp.float32),
    )(x, gamma, beta)


def _fc_kernel(x_ref, w_ref, b_ref, o_ref):
    # lane-dense output: Dout is padded to a multiple of 128 by the caller.
    o_ref[...] = _mm(x_ref[...], w_ref[...], b_ref[...])


def fc(x, w, b):
    n, dout = x.shape[0], w.shape[1]
    return pl.pallas_call(
        _fc_kernel,
        out_shape=jax.ShapeDtypeStruct((n, dout), jnp.float32),
    )(x, w, b)


def _encoder_layer_kernel(x_ref, mb_ref,
                          wqkv_ref, bqkv_ref, wo_ref, bo_ref,
                          ln1_g_ref, ln1_b_ref,
                          w1_ref, b1_ref, w2_ref, b2_ref,
                          ln2_g_ref, ln2_b_ref,
                          o_ref, *, batch, seq):
    """One full transformer encoder layer, fully resident in VMEM."""
    x = x_ref[...]                                    # [B*S, H] f32
    scale = 1.0 / math.sqrt(HEAD_DIM)

    # --- fused QKV projection: single MXU pass over x, N = 3H ---
    qkv = _mm(x, wqkv_ref[...], bqkv_ref[...])        # [B*S, 3H]
    q = qkv[:, 0 * HIDDEN:1 * HIDDEN] * scale         # pre-scale q (cheaper than scaling S*S)
    k = qkv[:, 1 * HIDDEN:2 * HIDDEN]
    v = qkv[:, 2 * HIDDEN:3 * HIDDEN]

    mb = mb_ref[...].reshape(batch, 1, seq)           # [B, 1, S] additive mask bias

    # --- multi-head attention; heads unrolled statically, all data in VMEM ---
    ctx_heads = []
    for h in range(N_HEADS):
        sl = slice(h * HEAD_DIM, (h + 1) * HEAD_DIM)
        qh = q[:, sl].reshape(batch, seq, HEAD_DIM)
        kh = k[:, sl].reshape(batch, seq, HEAD_DIM)
        vh = v[:, sl].reshape(batch, seq, HEAD_DIM)
        # batched over B; contracts last dims so k^T is never materialized
        s = jnp.einsum('bqd,bkd->bqk', qh.astype(MXU_DTYPE), kh.astype(MXU_DTYPE),
                       preferred_element_type=jnp.float32) + mb
        s = s - jnp.max(s, axis=-1, keepdims=True)
        p = jnp.exp(s)
        p = p * pl.reciprocal(jnp.sum(p, axis=-1, keepdims=True), approx=True)
        ch = jnp.einsum('bqk,bkd->bqd', p.astype(MXU_DTYPE), vh.astype(MXU_DTYPE),
                        preferred_element_type=jnp.float32)
        ctx_heads.append(ch.reshape(batch * seq, HEAD_DIM))
    ctx = jnp.concatenate(ctx_heads, axis=-1)         # [B*S, H]

    # --- attention output projection + Add & LayerNorm ---
    attn_out = _mm(ctx, wo_ref[...], bo_ref[...])
    x1 = _layernorm(attn_out + x, ln1_g_ref[...], ln1_b_ref[...])

    # --- FFN + GELU + Add & LayerNorm (elementwise kept in f32) ---
    h1 = _mm(x1, w1_ref[...], b1_ref[...])
    # TODO(synk): Electra default is exact erf-GELU; tanh-approx GELU used here.
    h1 = 0.5 * h1 * (1.0 + jnp.tanh(0.7978845608028654 * (h1 + 0.044715 * h1 * h1 * h1)))
    ffn_out = _mm(h1, w2_ref[...], b2_ref[...])
    o_ref[...] = _layernorm(ffn_out + x1, ln2_g_ref[...], ln2_b_ref[...])


def encoder_layer(x, mask_bias, layer, *, batch, seq):
    n = x.shape[0]
    return pl.pallas_call(
        functools.partial(_encoder_layer_kernel, batch=batch, seq=seq),
        out_shape=jax.ShapeDtypeStruct((n, HIDDEN), jnp.float32),
    )(x, mask_bias,
      layer["wqkv"], layer["bqkv"], layer["wo"], layer["bo"],
      layer["ln1_g"], layer["ln1_b"],
      layer["w1"], layer["b1"], layer["w2"], layer["b2"],
      layer["ln2_g"], layer["ln2_b"])


# --------------------------- parameters ---------------------------

def init_params(key):
    def nrm(k, shape):
        return 0.02 * jax.random.normal(k, shape, dtype=jnp.float32)

    keys = iter(jax.random.split(key, 4 + N_LAYERS * 6))

    fc_w = nrm(next(keys), (HIDDEN, OUTPUT_DIM))
    fc_w_pad = jnp.zeros((HIDDEN, OUT_PAD), jnp.float32).at[:, :OUTPUT_DIM].set(fc_w)

    params = {
        "wte": nrm(next(keys), (VOCAB, HIDDEN)),
        "wpe": nrm(next(keys), (MAX_POS, HIDDEN)),
        "tte": nrm(next(keys), (2, HIDDEN)),
        "emb_ln_g": jnp.ones((1, HIDDEN), jnp.float32),
        "emb_ln_b": jnp.zeros((1, HIDDEN), jnp.float32),
        "fc_w_pad": fc_w_pad,
        "fc_b_pad": jnp.zeros((1, OUT_PAD), jnp.float32),
        "layers": [],
    }
    for _ in range(N_LAYERS):
        wq = nrm(next(keys), (HIDDEN, HIDDEN))
        wk = nrm(next(keys), (HIDDEN, HIDDEN))
        wv = nrm(next(keys), (HIDDEN, HIDDEN))
        layer = {
            # fused QKV weight/bias: [H, 3H] / [1, 3H]
            "wqkv": jnp.concatenate([wq, wk, wv], axis=1),
            "bqkv": jnp.zeros((1, 3 * HIDDEN), jnp.float32),
            "wo": nrm(next(keys), (HIDDEN, HIDDEN)), "bo": jnp.zeros((1, HIDDEN), jnp.float32),
            "ln1_g": jnp.ones((1, HIDDEN), jnp.float32), "ln1_b": jnp.zeros((1, HIDDEN), jnp.float32),
            "w1": nrm(next(keys), (HIDDEN, FFN_DIM)), "b1": jnp.zeros((1, FFN_DIM), jnp.float32),
            "w2": nrm(next(keys), (FFN_DIM, HIDDEN)), "b2": jnp.zeros((1, HIDDEN), jnp.float32),
            "ln2_g": jnp.ones((1, HIDDEN), jnp.float32), "ln2_b": jnp.zeros((1, HIDDEN), jnp.float32),
        }
        params["layers"].append(layer)
    return params


# --------------------------- forward (BERTPoSTagger.forward) ---------------------------

def bert_pos_tagger_forward(params, text, mask):
    B, S = text.shape

    # --- embeddings (gather = glue) + LayerNorm-only Pallas kernel ---
    pos = jnp.arange(S)
    emb = (params["wte"][text]
           + params["wpe"][pos][None, :, :]
           + params["tte"][0][None, None, :])        # token_type_ids are all 0 for this tagger
    x = emb.reshape(B * S, HIDDEN).astype(jnp.float32)
    x = layernorm(x, params["emb_ln_g"], params["emb_ln_b"])

    # additive attention mask bias: 0 for real tokens, -1e4 for padding, [B, S]
    mask_bias = (1.0 - mask.astype(jnp.float32)) * -10000.0

    for layer in params["layers"]:
        x = encoder_layer(x, mask_bias, layer, batch=B, seq=S)

    # TODO(synk): nn.Dropout is identity in eval mode; stochastic dropout omitted.
    logits_pad = fc(x, params["fc_w_pad"], params["fc_b_pad"])   # [B*S, OUT_PAD] lane-dense store
    return logits_pad[:, :OUTPUT_DIM].reshape(B, S, OUTPUT_DIM)


# --------------------------- demo ---------------------------

if __name__ == "__main__":
    key = jax.random.PRNGKey(0)
    pkey, tkey = jax.random.split(key)
    params = init_params(pkey)

    B, S = 2, 8
    text = jax.random.randint(tkey, (B, S), 0, VOCAB, dtype=jnp.int32)
    mask = jnp.ones((B, S), dtype=jnp.int32).at[1, 6:].set(0)  # pad tail of seq 1

    out = bert_pos_tagger_forward(params, text, mask)
    jax.block_until_ready(out)
    assert out.shape == (B, S, OUTPUT_DIM)
    print("KERNEL_OK")
</pallas_src>

<mosaic_0001>
module attributes {stable_mosaic.version = 11 : i64} {
  func.func @_layernorm_kernel(%arg0: memref<16x32xf32, #tpu.memory_space<vmem>>, %arg1: memref<1x32xf32, #tpu.memory_space<vmem>>, %arg2: memref<1x32xf32, #tpu.memory_space<vmem>>, %arg3: memref<16x32xf32, #tpu.memory_space<vmem>>) attributes {dimension_semantics = [], scalar_prefetch = 0 : i64, scratch_operands = 0 : i64, tpu.core_type = #tpu.core_type<tc>} {
    %c0 = arith.constant 0 : index
    %c0_0 = arith.constant 0 : index
    %0 = vector.load %arg0[%c0, %c0_0] : memref<16x32xf32, #tpu.memory_space<vmem>>, vector<16x32xf32>
    %c0_1 = arith.constant 0 : index
    %c0_2 = arith.constant 0 : index
    %1 = vector.load %arg1[%c0_1, %c0_2] : memref<1x32xf32, #tpu.memory_space<vmem>>, vector<1x32xf32>
    %c0_3 = arith.constant 0 : index
    %c0_4 = arith.constant 0 : index
    %2 = vector.load %arg2[%c0_3, %c0_4] : memref<1x32xf32, #tpu.memory_space<vmem>>, vector<1x32xf32>
    %cst = arith.constant dense<0.000000e+00> : vector<16xf32>
    %3 = vector.multi_reduction <add>, %0, %cst [1] : vector<16x32xf32> to vector<16xf32>
    %4 = vector.shape_cast %3 : vector<16xf32> to vector<16x1xf32>
    %cst_5 = arith.constant 3.200000e+01 : f32
    %5 = vector.broadcast %cst_5 : f32 to vector<16x1xf32>
    %6 = arith.divf %4, %5 : vector<16x1xf32>
    %7 = vector.broadcast %6 : vector<16x1xf32> to vector<16x32xf32>
    %8 = arith.subf %0, %7 : vector<16x32xf32>
    %9 = arith.mulf %8, %8 : vector<16x32xf32>
    %cst_6 = arith.constant dense<0.000000e+00> : vector<16xf32>
    %10 = vector.multi_reduction <add>, %9, %cst_6 [1] : vector<16x32xf32> to vector<16xf32>
    %11 = vector.shape_cast %10 : vector<16xf32> to vector<16x1xf32>
    %cst_7 = arith.constant 3.200000e+01 : f32
    %12 = vector.broadcast %cst_7 : f32 to vector<16x1xf32>
    %13 = arith.divf %11, %12 : vector<16x1xf32>
    %14 = vector.broadcast %6 : vector<16x1xf32> to vector<16x32xf32>
    %15 = arith.subf %0, %14 : vector<16x32xf32>
    %cst_8 = arith.constant 9.99999996E-13 : f32
    %16 = vector.broadcast %cst_8 : f32 to vector<16x1xf32>
    %17 = arith.addf %13, %16 : vector<16x1xf32>
    %18 = math.rsqrt %17 : vector<16x1xf32>
    %19 = vector.broadcast %18 : vector<16x1xf32> to vector<16x32xf32>
    %20 = arith.mulf %15, %19 : vector<16x32xf32>
    %21 = vector.broadcast %1 : vector<1x32xf32> to vector<16x32xf32>
    %22 = arith.mulf %20, %21 : vector<16x32xf32>
    %23 = vector.broadcast %2 : vector<1x32xf32> to vector<16x32xf32>
    %24 = arith.addf %22, %23 : vector<16x32xf32>
    %c0_9 = arith.constant 0 : index
    %c0_10 = arith.constant 0 : index
    %25 = vector.load %arg3[%c0_9, %c0_10] : memref<16x32xf32, #tpu.memory_space<vmem>>, vector<16x32xf32>
    tpu.vector_store %arg3[%c0_9, %c0_10], %24 {strides = array<i32>} : memref<16x32xf32, #tpu.memory_space<vmem>>, vector<16x32xf32>,
    return
  }
}

</mosaic_0001>

<llo_original>
// kernel: tpu_custom_call.1
$region0: #{tpu_custom_call.1}
  #allocation0 [shape = 'u32[]', space=smem, size = 0x4, offset = 0x4, fixed_abs, tag = 'smem constant byte address 0x4 - core index']
  #allocation1 [shape = 'u32[72,128]{1,0:T(1,128)}', space=vmem, size = 0x9000, scoped, tag = 'internal scratch']
  %s0 = inlined_call_operand.hbm [shape: f32[16,32], index: 0, kind: input, shape index: {}]
  %s1 = inlined_call_operand.hbm [shape: f32[1,32], index: 1, kind: input, shape index: {}]
  %s2 = inlined_call_operand.vmem [shape: f32[1,32], index: 2, kind: input, shape index: {}]
  %s3 = inlined_call_operand.hbm [shape: f32[16,32], index: 3, kind: output, shape index: {}]
  %s4 = sld [smem:[#allocation0]]
  $region30: #{tpu_custom_call.1} parent=0
    _
  %s6 = ssub.s32 1, %s4
  %s7 = scalar_select 0, %s6, %s4
  $region1: #{tpu_custom_call.1} parent=0
    #allocation2 [shape = 'u8[8192]{0}', space=vmem, size = 0x2000, scoped, tag = 'input window, operand 0, single buffered']
    #allocation3 [shape = 's32[1]{0}', space=sflag, size = 0x4, scoped, tag = 'scoped memory for tpu_custom_call.1']
    #allocation4 [shape = 's32[1]{0}', space=sflag, size = 0x4, scoped, tag = 'scoped memory for tpu_custom_call.1']
    #allocation5 [shape = 'u8[512]{0}', space=vmem, size = 0x400, scoped, tag = 'input window, operand 1, single buffered']
    #allocation6 [shape = 's32[1]{0}', space=sflag, size = 0x4, scoped, tag = 'scoped memory for tpu_custom_call.1']
    #allocation7 [shape = 'u8[8192]{0}', space=vmem, size = 0x2000, scoped, tag = 'output window, operand 0, single buffered']
    %8 = vsyncpa [#allocation3], 0
    %9 = vsyncpa [#allocation6], 0
    %10 = vsyncpa [#allocation4], 0
    // Predicated region
    $region2: #{tpu_custom_call.1} parent=1 // pred_check
      _
    $region3: #{tpu_custom_call.1} parent=1 // pred_check_branch
      %12 = sbr.rel (0) target = $region5
    $region4: #{tpu_custom_call.1} parent=1 // pred_region
      %14 = vsyncadd [#allocation3], 0
      %s15 = sshll.u32 %s0, 4
      %s16 = int_to_ptr.hbm [resolvable:$true] %s15
      %s17 = sshll.u32 [#allocation2], 4
      %s18 = int_to_ptr.vmem [resolvable:$true] %s17
      %23 = dma.hbm_to_vmem [thread:$0]  %s16, 256, %s18, [#allocation3], 128, 128, 8
    $region5: #{tpu_custom_call.1} parent=1 // pred_fallthru
      _
    // Predicated region
    $region6: #{tpu_custom_call.1} parent=1 // pred_check
      _
    $region7: #{tpu_custom_call.1} parent=1 // pred_check_branch
      %25 = sbr.rel (0) target = $region9
    $region8: #{tpu_custom_call.1} parent=1 // pred_region
      %27 = vsyncadd [#allocation6], 0
      %s29 = sshll.u32 %s1, 4
      %s30 = int_to_ptr.hbm [resolvable:$true] %s29
      %s31 = sshll.u32 [#allocation5], 4
      %s32 = int_to_ptr.vmem [resolvable:$true] %s31
      %34 = dma.hbm_to_vmem [thread:$0]  %s30, 16, %s32, [#allocation6]
    $region9: #{tpu_custom_call.1} parent=1 // pred_fallthru
      _
    // Predicated region
    $region10: #{tpu_custom_call.1} parent=1 // pred_check
      _
    $region11: #{tpu_custom_call.1} parent=1 // pred_check_branch
      %36 = sbr.rel (0) target = $region13
    $region12: #{tpu_custom_call.1} parent=1 // pred_region
      _
    $region13: #{tpu_custom_call.1} parent=1 // pred_fallthru
      _
    // Predicated region
    $region14: #{tpu_custom_call.1} parent=1 // pred_check
      _
    $region15: #{tpu_custom_call.1} parent=1 // pred_check_branch
      %38 = sbr.rel (0) target = $region17
    $region16: #{tpu_custom_call.1} parent=1 // pred_region
      %40 = dma.done [#allocation3], 256
    $region17: #{tpu_custom_call.1} parent=1 // pred_fallthru
      _
    // Predicated region
    $region18: #{tpu_custom_call.1} parent=1 // pred_check
      _
    $region19: #{tpu_custom_call.1} parent=1 // pred_check_branch
      %42 = sbr.rel (0) target = $region21
    $region20: #{tpu_custom_call.1} parent=1 // pred_region
      %44 = dma.done [#allocation6], 16
    $region21: #{tpu_custom_call.1} parent=1 // pred_fallthru
      _
    %v45 = vld [vmem:[#allocation2] sm:$0xff]
    %v46 = vld [vmem:[#allocation2 + $0x8] sm:$0xff]
    %v47 = vld [vmem:[#allocation5] sm:$0x1]
    %v48 = vld [vmem:[%s2] sm:$0x1]
    %vm49 = vcmask 261120
    %v50 = vsel %vm49, %v45, 0.0
    %51 = vadd.xlane.f32.xlu0 %v50
    %v52 = vpop.xlane.xlu0 %51
    %v53 = vsel %vm49, %v46, 0.0
    %54 = vadd.xlane.f32.xlu0 %v53
    %v55 = vpop.xlane.xlu0 %54
    %v56 = vrcp.pop 32.0
    %v57 = vmul.f32 32.0, %v56
    %v58 = vsub.f32 1.0, %v57
    %v59 = vmul.f32 %v56, %v58
    %v60 = vadd.f32 %v56, %v59
    %vm61 = vweird.f32 %v56
    %v62 = vsel %vm61, %v56, %v60
    %v63 = vmul.f32 %v52, %v62
    %v64 = vmul.f32 %v55, %v62
    %v65 = vsub.f32 %v45, %v63
    %v66 = vsub.f32 %v46, %v64
    %v67 = vmul.f32 %v65, %v65
    %v68 = vmul.f32 %v66, %v66
    %v69 = vsel %vm49, %v67, 0.0
    %70 = vadd.xlane.f32.xlu0 %v69
    %v71 = vpop.xlane.xlu0 %70
    %v72 = vsel %vm49, %v68, 0.0
    %73 = vadd.xlane.f32.xlu0 %v72
    %v74 = vpop.xlane.xlu0 %73
    %v75 = vmul.f32 %v71, %v62
    %v76 = vmul.f32 %v74, %v62
    %v77 = vadd.f32 %v75, 1e-12
    %v78 = vadd.f32 %v76, 1e-12
    %v79 = vrsqrt.pop %v77
    %v80 = vmul.f32 %v79, %v77
    %v81 = vmul.f32 %v80, %v79
    %v82 = vmul.f32 0.5, %v81
    %v83 = vsub.f32 1.5, %v82
    %v84 = vmul.f32 %v79, %v83
    %vm85 = vweird.f32 %v77
    %vm86 = vweird.f32 %v79
    %vm87 = vmor %vm85, %vm86
    %v88 = vsel %vm87, %v79, %v84
    %v89 = vrsqrt.pop %v78
    %v90 = vmul.f32 %v89, %v78
    %v91 = vmul.f32 %v90, %v89
    %v92 = vmul.f32 0.5, %v91
    %v93 = vsub.f32 1.5, %v92
    %v94 = vmul.f32 %v89, %v93
    %vm95 = vweird.f32 %v78
    %vm96 = vweird.f32 %v89
    %vm97 = vmor %vm95, %vm96
    %v98 = vsel %vm97, %v89, %v94
    %v99 = vmul.f32 %v65, %v88
    %v100 = vmul.f32 %v66, %v98
    %v102 = vperm.slane %v47, 0
    %v104 = vmul.f32 %v99, %v102
    %v105 = vmul.f32 %v100, %v102
    %v107 = vperm.slane %v48, 0
    %v109 = vadd.f32 %v104, %v107
    %v110 = vadd.f32 %v105, %v107
    %111 = vst.msk [vmem:[#allocation7] sm:$0xff] %vm49, %v109
    %112 = vst.msk [vmem:[#allocation7 + $0x8] sm:$0xff] %vm49, %v110
    // Predicated region
    $region22: #{tpu_custom_call.1} parent=1 // pred_check
      _
    $region23: #{tpu_custom_call.1} parent=1 // pred_check_branch
      %114 = sbr.rel (0) target = $region25
    $region24: #{tpu_custom_call.1} parent=1 // pred_region
      %116 = vsyncadd [#allocation4], 0
      %s117 = sshll.u32 [#allocation7], 4
      %s118 = int_to_ptr.vmem [resolvable:$true] %s117
      %s119 = sshll.u32 %s3, 4
      %s120 = int_to_ptr.hbm [resolvable:$true] %s119
      %125 = dma.vmem_to_hbm [thread:$0]  %s118, 256, %s120, [#allocation4], 128, 128, 8
    $region25: #{tpu_custom_call.1} parent=1 // pred_fallthru
      _
    // Predicated region
    $region26: #{tpu_custom_call.1} parent=1 // pred_check
      _
    $region27: #{tpu_custom_call.1} parent=1 // pred_check_branch
      %127 = sbr.rel (0) target = $region29
    $region28: #{tpu_custom_call.1} parent=1 // pred_region
      %129 = dma.done [#allocation4], 256
    $region29: #{tpu_custom_call.1} parent=1 // pred_fallthru
      _
    %130 = vsyncpa [#allocation3], 1
    %131 = vsyncpa [#allocation6], 1
    %132 = vsyncpa [#allocation4], 1

</llo_original>
